<compile_context>
chip_gen: v7x
topology: tpu7x:2x2x1
jax: 0.10.0
libtpu: 0.0.40
codegen_flags: <defaults>
</compile_context>

<pallas_src>
from functools import partial

import numpy as np
import jax
import jax.numpy as jnp
from jax.experimental import pallas as pl
from jax.experimental.pallas import tpu as pltpu

NUM_CORES = 2          # leading "parallel" grid axis (v7x megacore split)
LANES = 128            # accumulator lane width (unmasked full-lane stores)


def _round_up(x, m):
    return ((x + m - 1) // m) * m


def _squeeze0(x):
    # torch's .squeeze(0): only squeezes if the leading dim is 1
    return jnp.squeeze(x, 0) if x.shape[0] == 1 else x


# ---------------------------------------------------------------------------
# Pallas kernel
# ---------------------------------------------------------------------------
def _ce_kernel(tile_term_ref, tile_center_ref, temps_ref,
               xs_ref, xt_ref, c_ref, m_ref, cesum_ref, msum_ref, *, tpc):
    c = pl.program_id(0)          # core / parallel slice
    t = pl.program_id(1)          # tile within this core's slice

    @pl.when(t == 0)
    def _():
        cesum_ref[...] = jnp.zeros_like(cesum_ref)
        msum_ref[...] = jnp.zeros_like(msum_ref)

    inv_s = temps_ref[0]          # 1 / student_temp  (multiply, not divide)
    inv_t = temps_ref[1]          # 1 / teacher_temp
    term = tile_term_ref[c * tpc + t]          # which CE term this tile belongs to

    # Inputs stay in their native dtype in HBM; upcast after the DMA.
    xs = xs_ref[...].astype(jnp.float32) * inv_s
    xt = (xt_ref[...].astype(jnp.float32) - c_ref[0]) * inv_t   # centering
    msk = m_ref[...]                                            # (TR, 1) {0,1}

    # teacher target: unnormalized softmax weights; the 1/sum normalization is
    # folded into the per-row reduction below (no full (TR, D) divide).
    xt = xt - jnp.max(xt, axis=-1, keepdims=True)
    et = jnp.exp(xt)
    z = jnp.sum(et, axis=-1, keepdims=True)                     # (TR, 1)

    # student: masked_fill(mask == 0, 1e-9) then log_softmax over last dim
    xs = jnp.where(msk != 0.0, xs, jnp.float32(1e-9))
    xs = xs - jnp.max(xs, axis=-1, keepdims=True)
    logp = xs - jnp.log(jnp.sum(jnp.exp(xs), axis=-1, keepdims=True))

    s_row = jnp.sum(-et * logp, axis=-1, keepdims=True)         # (TR, 1)
    # EUP approximate reciprocal + one Newton step on the VPU: exact-divide
    # accuracy without adding TR*D divides to the (EUP-bound) exp/log path.
    r = pl.reciprocal(z, approx=True)
    r = r * (2.0 - z * r)
    ce_row = s_row * r                                          # (TR, 1)

    ce_part = jnp.sum(ce_row * msk, keepdims=True)              # (1, 1)
    m_part = jnp.sum(msk, keepdims=True)                        # (1, 1)

    # one-hot accumulate into this term's accumulator row (full-lane stores)
    sel = jax.lax.broadcasted_iota(jnp.int32, cesum_ref.shape, 0) == term
    cesum_ref[...] += jnp.where(sel, ce_part, 0.0)
    msum_ref[...] += jnp.where(sel, m_part, 0.0)


def udi_cross_entropy_terms_pallas(terms, centers, student_temp, teacher_temp):
    """All UDI cross-entropy terms in a SINGLE pallas_call.

    terms: list of (x_s, x_t, mask_or_None, center_row_index).
    Per term:  t = softmax((x_t - center) / teacher_temp)
               s = masked_fill(x_s / student_temp, mask==0, 1e-9)
               ce = sum(-t * log_softmax(s), -1); loss = sum(ce*mask)/sum(mask)
    mask=None reproduces ce.mean() via an all-ones mask.
    Returns a list of per-term scalar losses (same order as `terms`).
    """
    num_ctr, D = centers.shape
    num_terms = len(terms)

    xs_list, xt_list, m_list, rows, center_ids = [], [], [], [], []
    for x_s, x_t, msk, cj in terms:
        xs2 = x_s.reshape(-1, D)
        xt2 = x_t.reshape(-1, D)
        r = xs2.shape[0]
        m2 = (jnp.ones((r, 1), jnp.float32) if msk is None
              else msk.reshape(-1, 1).astype(jnp.float32))
        xs_list.append(xs2)
        xt_list.append(xt2)
        m_list.append(m2)
        rows.append(r)
        center_ids.append(int(cj))

    # Keep the native dtype on the host (e.g. bf16 heads stay bf16 in HBM);
    # the kernel upcasts to f32 after the DMA.
    in_dtype = jnp.result_type(*[x.dtype for x in xs_list + xt_list])
    itemsize = jnp.dtype(in_dtype).itemsize

    # D-aware row tile: 2 inputs x 2 pipeline buffers of (TR, D) must fit a
    # conservative VMEM budget (v7x has only 64 MiB physical / 32 MiB scoped).
    vmem_block_budget = 12 * 1024 * 1024
    tr_vmem = max(8, vmem_block_budget // (2 * 2 * D * itemsize))
    TR = int(min(2048, tr_vmem, _round_up(max(rows), 8)))
    TR = max(8, (TR // 8) * 8)

    # Pad every term to whole tiles; build per-tile term / center lookup tables.
    tile_term, tile_center = [], []
    xs_pad, xt_pad, m_pad = [], [], []
    for j in range(num_terms):
        r = rows[j]
        r_pad = _round_up(r, TR)
        n_tiles = r_pad // TR
        tile_term += [j] * n_tiles
        tile_center += [center_ids[j]] * n_tiles
        pad = r_pad - r
        xs_pad.append(jnp.pad(xs_list[j].astype(in_dtype), ((0, pad), (0, 0))))
        xt_pad.append(jnp.pad(xt_list[j].astype(in_dtype), ((0, pad), (0, 0))))
        m_pad.append(jnp.pad(m_list[j], ((0, pad), (0, 0))))   # padded rows: mask 0

    xs_all = jnp.concatenate(xs_pad, axis=0)
    xt_all = jnp.concatenate(xt_pad, axis=0)
    m_all = jnp.concatenate(m_pad, axis=0)

    # Split tiles over NUM_CORES ("parallel" leading axis -> both v7x TCs);
    # dummy tiles (all-zero rows, mask 0) pad the tile count and contribute 0.
    n_tiles_total = len(tile_term)
    tpc = max(1, -(-n_tiles_total // NUM_CORES))          # tiles per core (ceil)
    n_tiles_grid = NUM_CORES * tpc
    extra_rows = n_tiles_grid * TR - xs_all.shape[0]
    if extra_rows:
        xs_all = jnp.pad(xs_all, ((0, extra_rows), (0, 0)))
        xt_all = jnp.pad(xt_all, ((0, extra_rows), (0, 0)))
        m_all = jnp.pad(m_all, ((0, extra_rows), (0, 0)))
    tile_term += [0] * (n_tiles_grid - n_tiles_total)
    tile_center += [0] * (n_tiles_grid - n_tiles_total)

    tile_term = jnp.asarray(tile_term, jnp.int32)
    tile_center = jnp.asarray(tile_center, jnp.int32)
    temps = jnp.array([1.0 / student_temp, 1.0 / teacher_temp], jnp.float32)
    centers3 = centers.reshape(num_ctr, 1, D).astype(jnp.float32)

    t_pad = _round_up(max(num_terms, 1), 8)               # accumulator rows per core

    ce_sums, m_sums = pl.pallas_call(
        partial(_ce_kernel, tpc=tpc),
        out_shape=[jax.ShapeDtypeStruct((NUM_CORES * t_pad, LANES), jnp.float32),
                   jax.ShapeDtypeStruct((NUM_CORES * t_pad, LANES), jnp.float32)],
        grid_spec=pltpu.PrefetchScalarGridSpec(
            num_scalar_prefetch=2,                         # tile_term, tile_center
            grid=(NUM_CORES, tpc),
            in_specs=[
                pl.BlockSpec(memory_space=pltpu.MemorySpace.SMEM),            # temps (2,)
                pl.BlockSpec((TR, D), lambda c, t, tt, tc: (c * tpc + t, 0)),  # student rows
                pl.BlockSpec((TR, D), lambda c, t, tt, tc: (c * tpc + t, 0)),  # teacher rows
                pl.BlockSpec((1, 1, D),
                             lambda c, t, tt, tc: (tc[c * tpc + t], 0, 0)),    # per-term center
                pl.BlockSpec((TR, 1), lambda c, t, tt, tc: (c * tpc + t, 0)),  # mask
            ],
            out_specs=[pl.BlockSpec((t_pad, LANES), lambda c, t, tt, tc: (c, 0)),
                       pl.BlockSpec((t_pad, LANES), lambda c, t, tt, tc: (c, 0))],
        ),
        compiler_params=pltpu.CompilerParams(
            dimension_semantics=("parallel", "arbitrary"),
            vmem_limit_bytes=32 * 1024 * 1024),
    )(tile_term, tile_center, temps, xs_all, xt_all, centers3, m_all)

    ce_per_term = ce_sums[:, 0].reshape(NUM_CORES, t_pad).sum(axis=0)[:num_terms]
    m_per_term = m_sums[:, 0].reshape(NUM_CORES, t_pad).sum(axis=0)[:num_terms]
    losses = ce_per_term / m_per_term     # NaN if a mask is all-zero, same as torch
    return [losses[j] for j in range(num_terms)]


# ---------------------------------------------------------------------------
# Pure-JAX reference (for validation)
# ---------------------------------------------------------------------------
def masked_cross_entropy_ref(x_s, x_t, center, mask, student_temp, teacher_temp):
    tgt = jax.nn.softmax((x_t - center) / teacher_temp, axis=-1)
    xs = x_s / student_temp
    if mask is not None:
        xs = jnp.where(mask != 0, xs, 1e-9)
        ce = jnp.sum(-tgt * jax.nn.log_softmax(xs, axis=-1), axis=-1)
        return jnp.sum(ce * jnp.squeeze(mask, -1)) / jnp.sum(mask)
    ce = jnp.sum(-tgt * jax.nn.log_softmax(xs, axis=-1), axis=-1)
    return jnp.mean(ce)


def udi_cross_entropy_terms_ref(terms, centers, student_temp, teacher_temp):
    return [masked_cross_entropy_ref(x_s, x_t, centers[cj], msk,
                                     student_temp, teacher_temp)
            for (x_s, x_t, msk, cj) in terms]


class UDILoss:
    """JAX/Pallas port of the PyTorch UDILoss forward pass."""

    def __init__(self, num_local_crops, dim, teacher_temp_schedule, include_cls=True,
                 include_patch=True, num_clt=2, alpha=0.5, student_temp=0.1,
                 center_momentum=0.9, weights=None,
                 ce_terms_fn=udi_cross_entropy_terms_pallas):
        self.student_temp = student_temp
        self.num_clt = num_clt
        self.dim = dim
        self.num_local_crops = num_local_crops
        self.teacher_temp_schedule = teacher_temp_schedule
        self.alpha = alpha
        self.include_cls = include_cls
        self.include_patch = include_patch
        self.num_ctr = num_clt + int(include_patch)
        self.weights = weights or [1.0 / self.num_ctr] * self.num_ctr
        self.center_momentum = center_momentum
        # Centering buffer: zeros, exactly as Centering.__init__ does
        self.center = jnp.zeros((self.num_ctr, dim), jnp.float32)
        self.ce_terms_fn = ce_terms_fn

    # ---- plain-JAX glue: reshapes / target construction --------------------
    def data_preparation(self, teacher_output):
        p, m = teacher_output
        nl = self.num_local_crops
        D = self.dim
        if self.include_cls:
            p[1][0] = p[0][0]
            p[1][0] = jnp.tile(
                jnp.transpose(p[1][0].reshape(2, -1, D), (1, 0, 2)), (nl, 1, 1))
            if self.num_clt == 2 and self.include_patch:
                p[0][1] = jnp.sum(
                    p[0][2] * m[0][2] / (jnp.sum(m[0][2], -2, keepdims=True) + 1e-05),
                    -2, keepdims=True)
                p[1][1] = jnp.sum(
                    p[1][2] * m[1][2] / (jnp.sum(m[1][2], -2, keepdims=True) + 1e-05),
                    -2, keepdims=True)
                p[1][1] = jnp.transpose(
                    p[1][1].reshape(nl, 2, -1, D), (0, 2, 1, 3)).reshape(-1, 2, D)
                p[0][1] = self.alpha * _squeeze0(p[0][1]) + (1 - self.alpha) * p[0][0]
                p[1][1] = self.alpha * p[1][1] + (1 - self.alpha) * p[1][0]
        if self.include_patch:
            sp = p[1][-1].shape
            p[1][-1] = jnp.transpose(
                p[1][-1].reshape(nl, 2, -1, *sp[-2:]), (1, 0, 2, 3, 4)
            ).reshape(2, -1, *sp[-2:])
            sm = m[1][-1].shape
            m[1][-1] = jnp.transpose(
                m[1][-1].reshape(nl, 2, -1, *sm[-2:]), (1, 0, 2, 3, 4)
            ).reshape(2, -1, *sm[-2:])
        return [p, m]

    def _update_center(self, teacher_output, masks):
        D = self.dim
        sums = [jnp.zeros((D,), jnp.float32) for _ in range(self.num_ctr)]
        counts = [jnp.zeros((), jnp.float32) for _ in range(self.num_ctr)]
        for pred, mask, n in zip(teacher_output, masks, [0, 1]):
            for i, (p_, m_) in enumerate(zip(pred, mask)):
                if m_ is None:
                    if n == 1 and i == 0:
                        continue
                    counts[i] = counts[i] + p_.reshape(-1, D).shape[0]
                    sums[i] = sums[i] + jnp.sum(p_.reshape(-1, D), axis=0)
                else:
                    counts[i] = counts[i] + jnp.sum(m_)
                    sums[i] = sums[i] + jnp.sum((p_ * _squeeze0(m_)).reshape(-1, D), axis=0)
        batch = jnp.stack(sums) / jnp.stack(counts)[:, None]
        # TODO(synk): torch.distributed.all_reduce / world_size division omitted
        # (single-device EMA update only).
        return self.center * self.center_momentum + batch * (1 - self.center_momentum)

    def forward(self, student_output, teacher_output, epoch):
        pred_s = [list(x) for x in student_output[0]]
        mask_s = [list(x) for x in student_output[1]]
        p = [list(x) for x in teacher_output[0]]
        m = [list(x) for x in teacher_output[1]]
        pred_t, mask_t = self.data_preparation([p, m])

        temp = float(self.teacher_temp_schedule[epoch])
        out_t = [list(pred_t[0][:self.num_ctr]), list(pred_t[1][:self.num_ctr])]

        # Gather every CE term: student /= student_temp, teacher centering
        # softmax and the masked CE are all fused inside ONE batched Pallas call.
        terms, slots = [], []
        for i in range(2):
            for j, (t_raw, s_raw, msk) in enumerate(zip(pred_t[i], pred_s[i], mask_s[i])):
                terms.append((s_raw, t_raw, msk, j))
                slots.append(i)

        flat = self.ce_terms_fn(terms, self.center, self.student_temp, temp)

        loss = [[], []]
        for i, l in zip(slots, flat):
            loss[i].append(l)

        n1 = len(loss[1])
        loss[1] = loss[1] + [-1.0] * (len(loss[0]) - n1)
        loss_per_level = []
        nl = self.num_local_crops
        for idx, (l0, l1) in enumerate(zip(loss[0], loss[1])):
            use_l1 = 1 if idx < n1 else 0   # static (no device->host sync, jit-safe)
            l = (l0 * 2 + l1 * 2 * nl * use_l1) / (2 + 2 * nl * use_l1)
            loss_per_level.append(l)
        total_loss = sum(l * w for l, w in zip(loss_per_level, self.weights))
        self.center = self._update_center(out_t, mask_t)
        return total_loss, loss


if __name__ == "__main__":
    B, nl, D = 2, 2, 128       # batch, local crops, head/prototype dim
    Ng, Nl = 16, 8             # global / local patch tokens
    key = jax.random.PRNGKey(0)
    ks = jax.random.split(key, 16)

    def rnd(k, shape):
        return jax.random.normal(k, shape, dtype=jnp.float32)

    def bmask(k, shape):
        return (jax.random.uniform(k, shape) > 0.3).astype(jnp.float32)

    # output structure: [pred, mask]; pred = [global, local]; each = [cls1, cls2, patch]
    teacher_pred = [
        [rnd(ks[0], (2 * B, 1, D)),
         rnd(ks[1], (2 * B, 1, D)),
         rnd(ks[2], (2 * B, Ng, D))],
        [rnd(ks[3], (nl * B, 2, D)),
         rnd(ks[4], (nl * B, 2, D)),
         rnd(ks[5], (nl * 2 * B, Nl, D))],
    ]
    teacher_mask = [
        [None, None, bmask(ks[6], (2 * B, Ng, 1))],
        [None, None, bmask(ks[7], (nl * 2 * B, Nl, 1))],
    ]
    student_pred = [
        [rnd(ks[8], (2 * B, 1, D)),
         rnd(ks[9], (2 * B, 1, D)),
         rnd(ks[10], (2 * B, Ng, D))],
        [rnd(ks[11], (nl * B, 2, D)),
         rnd(ks[12], (nl * B, 2, D)),
         rnd(ks[13], (2, nl * B, Nl, D))],
    ]
    student_mask = [
        [None, None, bmask(ks[14], (2 * B, Ng, 1))],
        [None, None, bmask(ks[15], (2, nl * B, Nl, 1))],
    ]

    schedule = np.linspace(0.04, 0.07, 10).astype(np.float32)
    epoch = 3

    udi = UDILoss(num_local_crops=nl, dim=D, teacher_temp_schedule=schedule,
                  ce_terms_fn=udi_cross_entropy_terms_pallas)
    total_loss, loss = udi.forward([student_pred, student_mask],
                                   [teacher_pred, teacher_mask], epoch)
    total_loss = jax.block_until_ready(total_loss)

    # pure-JAX reference for validation
    udi_ref = UDILoss(num_local_crops=nl, dim=D, teacher_temp_schedule=schedule,
                      ce_terms_fn=udi_cross_entropy_terms_ref)
    total_ref, loss_ref = udi_ref.forward([student_pred, student_mask],
                                          [teacher_pred, teacher_mask], epoch)

    np.testing.assert_allclose(np.asarray(total_loss), np.asarray(total_ref),
                               rtol=5e-4, atol=5e-5)
    for a, b in zip(sum(loss, []), sum(loss_ref, [])):
        np.testing.assert_allclose(np.asarray(a), np.asarray(b), rtol=5e-4, atol=5e-5)
    np.testing.assert_allclose(np.asarray(udi.center), np.asarray(udi_ref.center),
                               rtol=1e-5, atol=1e-6)
    print("KERNEL_OK")
</pallas_src>

<mosaic_0001>
module attributes {stable_mosaic.version = 11 : i64} {
  func.func @_ce_kernel(%arg0: i32, %arg1: i32, %arg2: memref<6xi32, #tpu.memory_space<smem>>, %arg3: memref<6xi32, #tpu.memory_space<smem>>, %arg4: memref<2xf32, #tpu.memory_space<smem>>, %arg5: memref<64x128xf32, #tpu.memory_space<vmem>>, %arg6: memref<64x128xf32, #tpu.memory_space<vmem>>, %arg7: memref<1x1x128xf32, #tpu.memory_space<vmem>>, %arg8: memref<64x1xf32, #tpu.memory_space<vmem>>, %arg9: memref<8x128xf32, #tpu.memory_space<vmem>>, %arg10: memref<8x128xf32, #tpu.memory_space<vmem>>) attributes {dimension_semantics = [#tpu.dimension_semantics<parallel>, #tpu.dimension_semantics<arbitrary>], iteration_bounds = array<i64: 2, 3>, scalar_prefetch = 2 : i64, scratch_operands = 0 : i64, tpu.core_type = #tpu.core_type<tc>, window_params = [{transform_indices = @transform_0, window_bounds = array<i64: 2>}, {transform_indices = @transform_1, window_bounds = array<i64: 64, 128>}, {transform_indices = @transform_2, window_bounds = array<i64: 64, 128>}, {transform_indices = @transform_3, window_bounds = array<i64: 1, 1, 128>}, {transform_indices = @transform_4, window_bounds = array<i64: 64, 1>}, {transform_indices = @transform_5, window_bounds = array<i64: 8, 128>}, {transform_indices = @transform_6, window_bounds = array<i64: 8, 128>}]} {
    %c0_i32 = arith.constant 0 : i32
    %0 = arith.cmpi eq, %arg1, %c0_i32 : i32
    %1 = arith.extui %0 : i1 to i32
    %c0_i32_0 = arith.constant 0 : i32
    %2 = arith.cmpi ne, %1, %c0_i32_0 : i32
    scf.if %2 {
      %cst_30 = arith.constant 0.000000e+00 : f32
      %82 = vector.broadcast %cst_30 : f32 to vector<8x128xf32>
      %c0_31 = arith.constant 0 : index
      %c0_32 = arith.constant 0 : index
      %83 = vector.load %arg9[%c0_31, %c0_32] : memref<8x128xf32, #tpu.memory_space<vmem>>, vector<8x128xf32>
      tpu.vector_store %arg9[%c0_31, %c0_32], %82 {strides = array<i32>} : memref<8x128xf32, #tpu.memory_space<vmem>>, vector<8x128xf32>,
      %cst_33 = arith.constant 0.000000e+00 : f32
      %84 = vector.broadcast %cst_33 : f32 to vector<8x128xf32>
      %c0_34 = arith.constant 0 : index
      %c0_35 = arith.constant 0 : index
      %85 = vector.load %arg10[%c0_34, %c0_35] : memref<8x128xf32, #tpu.memory_space<vmem>>, vector<8x128xf32>
      tpu.vector_store %arg10[%c0_34, %c0_35], %84 {strides = array<i32>} : memref<8x128xf32, #tpu.memory_space<vmem>>, vector<8x128xf32>,
    } else {
    }
    %c0 = arith.constant 0 : index
    %3 = memref.load %arg4[%c0] : memref<2xf32, #tpu.memory_space<smem>>
    %c1 = arith.constant 1 : index
    %4 = memref.load %arg4[%c1] : memref<2xf32, #tpu.memory_space<smem>>
    %c3_i32 = arith.constant 3 : i32
    %5 = arith.muli %arg0, %c3_i32 : i32
    %6 = arith.addi %5, %arg1 : i32
    %7 = arith.index_cast %6 : i32 to index
    %8 = memref.load %arg2[%7] : memref<6xi32, #tpu.memory_space<smem>>
    %c0_1 = arith.constant 0 : index
    %c0_2 = arith.constant 0 : index
    %9 = vector.load %arg5[%c0_1, %c0_2] : memref<64x128xf32, #tpu.memory_space<vmem>>, vector<64x128xf32>
    %10 = vector.broadcast %3 : f32 to vector<64x128xf32>
    %11 = arith.mulf %9, %10 : vector<64x128xf32>
    %c0_3 = arith.constant 0 : index
    %c0_4 = arith.constant 0 : index
    %12 = vector.load %arg6[%c0_3, %c0_4] : memref<64x128xf32, #tpu.memory_space<vmem>>, vector<64x128xf32>
    %c0_5 = arith.constant 0 : index
    %c0_6 = arith.constant 0 : index
    %c0_7 = arith.constant 0 : index
    %13 = vector.load %arg7[%c0_5, %c0_6, %c0_7] : memref<1x1x128xf32, #tpu.memory_space<vmem>>, vector<1x1x128xf32>
    %14 = vector.shape_cast %13 : vector<1x1x128xf32> to vector<1x128xf32>
    %15 = vector.broadcast %14 : vector<1x128xf32> to vector<64x128xf32>
    %16 = arith.subf %12, %15 : vector<64x128xf32>
    %17 = vector.broadcast %4 : f32 to vector<64x128xf32>
    %18 = arith.mulf %16, %17 : vector<64x128xf32>
    %c0_8 = arith.constant 0 : index
    %c0_9 = arith.constant 0 : index
    %19 = vector.load %arg8[%c0_8, %c0_9] : memref<64x1xf32, #tpu.memory_space<vmem>>, vector<64x1xf32>
    %cst = arith.constant dense<0xFF800000> : vector<64xf32>
    %20 = vector.multi_reduction <maximumf>, %18, %cst [1] : vector<64x128xf32> to vector<64xf32>
    %21 = vector.shape_cast %20 : vector<64xf32> to vector<64x1xf32>
    %22 = vector.broadcast %21 : vector<64x1xf32> to vector<64x128xf32>
    %23 = arith.subf %18, %22 : vector<64x128xf32>
    %24 = math.exp %23 : vector<64x128xf32>
    %cst_10 = arith.constant dense<0.000000e+00> : vector<64xf32>
    %25 = vector.multi_reduction <add>, %24, %cst_10 [1] : vector<64x128xf32> to vector<64xf32>
    %26 = vector.shape_cast %25 : vector<64xf32> to vector<64x1xf32>
    %cst_11 = arith.constant 0.000000e+00 : f32
    %27 = vector.broadcast %cst_11 : f32 to vector<64x1xf32>
    %28 = arith.cmpf one, %19, %27 : vector<64x1xf32>
    %cst_12 = arith.constant 9.99999971E-10 : f32
    %29 = vector.shape_cast %28 : vector<64x1xi1> to vector<64x1xi1>
    %30 = vector.broadcast %29 : vector<64x1xi1> to vector<64x128xi1>
    %31 = vector.broadcast %cst_12 : f32 to vector<64x128xf32>
    %32 = arith.select %30, %11, %31 : vector<64x128xi1>, vector<64x128xf32>
    %cst_13 = arith.constant dense<0xFF800000> : vector<64xf32>
    %33 = vector.multi_reduction <maximumf>, %32, %cst_13 [1] : vector<64x128xf32> to vector<64xf32>
    %34 = vector.shape_cast %33 : vector<64xf32> to vector<64x1xf32>
    %35 = vector.broadcast %34 : vector<64x1xf32> to vector<64x128xf32>
    %36 = arith.subf %32, %35 : vector<64x128xf32>
    %37 = math.exp %36 : vector<64x128xf32>
    %cst_14 = arith.constant dense<0.000000e+00> : vector<64xf32>
    %38 = vector.multi_reduction <add>, %37, %cst_14 [1] : vector<64x128xf32> to vector<64xf32>
    %39 = vector.shape_cast %38 : vector<64xf32> to vector<64x1xf32>
    %40 = math.log %39 : vector<64x1xf32>
    %41 = vector.broadcast %40 : vector<64x1xf32> to vector<64x128xf32>
    %42 = arith.subf %36, %41 : vector<64x128xf32>
    %cst_15 = arith.constant 0.000000e+00 : f32
    %43 = vector.broadcast %cst_15 : f32 to vector<64x128xf32>
    %44 = arith.subf %43, %24 : vector<64x128xf32>
    %45 = arith.mulf %44, %42 : vector<64x128xf32>
    %cst_16 = arith.constant dense<0.000000e+00> : vector<64xf32>
    %46 = vector.multi_reduction <add>, %45, %cst_16 [1] : vector<64x128xf32> to vector<64xf32>
    %47 = vector.shape_cast %46 : vector<64xf32> to vector<64x1xf32>
    %48 = tpu.reciprocal %26 {approx = true} : vector<64x1xf32> -> vector<64x1xf32>
    %49 = arith.mulf %26, %48 : vector<64x1xf32>
    %cst_17 = arith.constant 2.000000e+00 : f32
    %50 = vector.broadcast %cst_17 : f32 to vector<64x1xf32>
    %51 = arith.subf %50, %49 : vector<64x1xf32>
    %52 = arith.mulf %48, %51 : vector<64x1xf32>
    %53 = arith.mulf %47, %52 : vector<64x1xf32>
    %54 = arith.mulf %53, %19 : vector<64x1xf32>
    %55 = vector.shape_cast %54 : vector<64x1xf32> to vector<1x64x1xf32>
    %cst_18 = arith.constant dense<0.000000e+00> : vector<1xf32>
    %56 = vector.multi_reduction <add>, %55, %cst_18 [1, 2] : vector<1x64x1xf32> to vector<1xf32>
    %57 = vector.shape_cast %56 : vector<1xf32> to vector<1x1x1xf32>
    %58 = vector.extract %57[0, 0, 0] : f32 from vector<1x1x1xf32>
    %59 = vector.broadcast %58 : f32 to vector<1x1xf32>
    %60 = vector.shape_cast %19 : vector<64x1xf32> to vector<1x64x1xf32>
    %cst_19 = arith.constant dense<0.000000e+00> : vector<1xf32>
    %61 = vector.multi_reduction <add>, %60, %cst_19 [1, 2] : vector<1x64x1xf32> to vector<1xf32>
    %62 = vector.shape_cast %61 : vector<1xf32> to vector<1x1x1xf32>
    %63 = vector.extract %62[0, 0, 0] : f32 from vector<1x1x1xf32>
    %64 = vector.broadcast %63 : f32 to vector<1x1xf32>
    %65 = tpu.iota {dimensions = array<i32: 0>} : vector<8x128xi32>
    %66 = vector.broadcast %8 : i32 to vector<8x128xi32>
    %67 = arith.cmpi eq, %65, %66 : vector<8x128xi32>
    %c0_20 = arith.constant 0 : index
    %c0_21 = arith.constant 0 : index
    %68 = vector.load %arg9[%c0_20, %c0_21] : memref<8x128xf32, #tpu.memory_space<vmem>>, vector<8x128xf32>
    %cst_22 = arith.constant 0.000000e+00 : f32
    %69 = vector.shape_cast %59 : vector<1x1xf32> to vector<1x1xf32>
    %70 = vector.broadcast %69 : vector<1x1xf32> to vector<8x128xf32>
    %71 = vector.broadcast %cst_22 : f32 to vector<8x128xf32>
    %72 = arith.select %67, %70, %71 : vector<8x128xi1>, vector<8x128xf32>
    %73 = arith.addf %68, %72 : vector<8x128xf32>
    %c0_23 = arith.constant 0 : index
    %c0_24 = arith.constant 0 : index
    %74 = vector.load %arg9[%c0_23, %c0_24] : memref<8x128xf32, #tpu.memory_space<vmem>>, vector<8x128xf32>
    tpu.vector_store %arg9[%c0_23, %c0_24], %73 {strides = array<i32>} : memref<8x128xf32, #tpu.memory_space<vmem>>, vector<8x128xf32>,
    %c0_25 = arith.constant 0 : index
    %c0_26 = arith.constant 0 : index
    %75 = vector.load %arg10[%c0_25, %c0_26] : memref<8x128xf32, #tpu.memory_space<vmem>>, vector<8x128xf32>
    %cst_27 = arith.constant 0.000000e+00 : f32
    %76 = vector.shape_cast %64 : vector<1x1xf32> to vector<1x1xf32>
    %77 = vector.broadcast %76 : vector<1x1xf32> to vector<8x128xf32>
    %78 = vector.broadcast %cst_27 : f32 to vector<8x128xf32>
    %79 = arith.select %67, %77, %78 : vector<8x128xi1>, vector<8x128xf32>
    %80 = arith.addf %75, %79 : vector<8x128xf32>
    %c0_28 = arith.constant 0 : index
    %c0_29 = arith.constant 0 : index
    %81 = vector.load %arg10[%c0_28, %c0_29] : memref<8x128xf32, #tpu.memory_space<vmem>>, vector<8x128xf32>
    tpu.vector_store %arg10[%c0_28, %c0_29], %80 {strides = array<i32>} : memref<8x128xf32, #tpu.memory_space<vmem>>, vector<8x128xf32>,
    return
  }
  func.func @transform_0(%arg0: i32, %arg1: i32, %arg2: memref<6xi32, #tpu.memory_space<smem>>, %arg3: memref<6xi32, #tpu.memory_space<smem>>) -> i32 {
    %c0_i32 = arith.constant 0 : i32
    %c0_i32_0 = arith.constant 0 : i32
    return %c0_i32 : i32
  }
  func.func @transform_1(%arg0: i32, %arg1: i32, %arg2: memref<6xi32, #tpu.memory_space<smem>>, %arg3: memref<6xi32, #tpu.memory_space<smem>>) -> (i32, i32) {
    %c3_i32 = arith.constant 3 : i32
    %0 = arith.muli %arg0, %c3_i32 : i32
    %1 = arith.addi %0, %arg1 : i32
    %c0_i32 = arith.constant 0 : i32
    %c0_i32_0 = arith.constant 0 : i32
    return %1, %c0_i32 : i32, i32
  }
  func.func @transform_2(%arg0: i32, %arg1: i32, %arg2: memref<6xi32, #tpu.memory_space<smem>>, %arg3: memref<6xi32, #tpu.memory_space<smem>>) -> (i32, i32) {
    %c3_i32 = arith.constant 3 : i32
    %0 = arith.muli %arg0, %c3_i32 : i32
    %1 = arith.addi %0, %arg1 : i32
    %c0_i32 = arith.constant 0 : i32
    %c0_i32_0 = arith.constant 0 : i32
    return %1, %c0_i32 : i32, i32
  }
  func.func @transform_3(%arg0: i32, %arg1: i32, %arg2: memref<6xi32, #tpu.memory_space<smem>>, %arg3: memref<6xi32, #tpu.memory_space<smem>>) -> (i32, i32, i32) {
    %c3_i32 = arith.constant 3 : i32
    %0 = arith.muli %arg0, %c3_i32 : i32
    %1 = arith.addi %0, %arg1 : i32
    %2 = arith.index_cast %1 : i32 to index
    %3 = memref.load %arg3[%2] : memref<6xi32, #tpu.memory_space<smem>>
    %c0_i32 = arith.constant 0 : i32
    %c0_i32_0 = arith.constant 0 : i32
    %c0_i32_1 = arith.constant 0 : i32
    return %3, %c0_i32, %c0_i32_0 : i32, i32, i32
  }
  func.func @transform_4(%arg0: i32, %arg1: i32, %arg2: memref<6xi32, #tpu.memory_space<smem>>, %arg3: memref<6xi32, #tpu.memory_space<smem>>) -> (i32, i32) {
    %c3_i32 = arith.constant 3 : i32
    %0 = arith.muli %arg0, %c3_i32 : i32
    %1 = arith.addi %0, %arg1 : i32
    %c0_i32 = arith.constant 0 : i32
    %c0_i32_0 = arith.constant 0 : i32
    return %1, %c0_i32 : i32, i32
  }
  func.func @transform_5(%arg0: i32, %arg1: i32, %arg2: memref<6xi32, #tpu.memory_space<smem>>, %arg3: memref<6xi32, #tpu.memory_space<smem>>) -> (i32, i32) {
    %c0_i32 = arith.constant 0 : i32
    %c0_i32_0 = arith.constant 0 : i32
    return %arg0, %c0_i32 : i32, i32
  }
  func.func @transform_6(%arg0: i32, %arg1: i32, %arg2: memref<6xi32, #tpu.memory_space<smem>>, %arg3: memref<6xi32, #tpu.memory_space<smem>>) -> (i32, i32) {
    %c0_i32 = arith.constant 0 : i32
    %c0_i32_0 = arith.constant 0 : i32
    return %arg0, %c0_i32 : i32, i32
  }
}

</mosaic_0001>

<llo_original>
// kernel: tpu_custom_call.1
$region0: #{tpu_custom_call.1}
  #allocation0 [shape = 'u32[]', space=smem, size = 0x4, offset = 0x4, fixed_abs, tag = 'smem constant byte address 0x4 - core index']
  #allocation1 [shape = 'u32[144,128]{1,0:T(1,128)}', space=vmem, size = 0x12000, scoped, tag = 'internal scratch']
  #allocation2 [shape = 's32[1]{0}', space=sflag, size = 0x4, scoped, tag = 'scoped memory for tpu_custom_call.1']
  #allocation3 [shape = 'u8[512]{0}', space=smem, size = 0x200, scoped, tag = 'prefetched SMEM operand 0']
  #allocation4 [shape = 'u8[512]{0}', space=smem, size = 0x200, scoped, tag = 'prefetched SMEM operand 1']
  %s0 = inlined_call_operand.vmem [shape: s32[6], index: 0, kind: input, shape index: {}]
  %s1 = inlined_call_operand.vmem [shape: s32[6], index: 1, kind: input, shape index: {}]
  %s2 = inlined_call_operand.vmem [shape: f32[2], index: 2, kind: input, shape index: {}]
  %s3 = inlined_call_operand.vmem [shape: f32[384,128], index: 3, kind: input, shape index: {}]
  %s4 = inlined_call_operand.hbm [shape: f32[384,128], index: 4, kind: input, shape index: {}]
  %s5 = inlined_call_operand.vmem [shape: f32[3,1,128], index: 5, kind: input, shape index: {}]
  %s6 = inlined_call_operand.vmem [shape: f32[384,1], index: 6, kind: input, shape index: {}]
  %s7 = inlined_call_operand.hbm [shape: f32[16,128], index: 7, kind: output, shape index: {0}]
  %s8 = inlined_call_operand.hbm [shape: f32[16,128], index: 8, kind: output, shape index: {1}]
  %9 = xla_tuple %s7, %s8
  %s10 = sld [smem:[#allocation0]]
  $region73: #{tpu_custom_call.1} parent=0
    _
  %s12 = ssub.s32 1, %s10
  %s13 = scalar_select 0, %s12, %s10
  %s14 = sshll.u32 %s0, 4
  %s15 = int_to_ptr.vmem [resolvable:$true] %s14
  %17 = dma.vmem_to_smem %s15, 16, [#allocation3], [#allocation2]
  %s18 = sshll.u32 %s1, 4
  %s19 = int_to_ptr.vmem [resolvable:$true] %s18
  %21 = dma.vmem_to_smem %s19, 16, [#allocation4], [#allocation2]
  %22 = dma.done [#allocation2], 32
  %23 = sfence
  $region1: #{tpu_custom_call.1} parent=0
    #allocation5 [shape = 'u8[512]{0}', space=smem, size = 0x200, scoped, tag = 'input window, operand 2, single buffered']
    #allocation6 [shape = 's32[2]{0}', space=sflag, size = 0x8, scoped, tag = 'scoped memory for tpu_custom_call.1']
    #allocation7 [shape = 's32[2]{0}', space=sflag, size = 0x8, scoped, tag = 'scoped memory for tpu_custom_call.1']
    #allocation8 [shape = 's32[2]{0}', space=sflag, size = 0x8, scoped, tag = 'scoped memory for tpu_custom_call.1']
    #allocation9 [shape = 'u8[65536]{0}', space=vmem, size = 0x10000, scoped, tag = 'input window, operand 4']
    #allocation10 [shape = 'u8[8192]{0}', space=vmem, size = 0x2000, scoped, tag = 'output window, operand 0']
    #allocation11 [shape = 'u8[8192]{0}', space=vmem, size = 0x2000, scoped, tag = 'output window, operand 1']
    #allocation12 [shape = 's32[2]{0}', space=sflag, size = 0x8, scoped, tag = 'scoped memory for tpu_custom_call.1']
    %24 = vsyncpa [#allocation8], 0
    %25 = vsyncpa [#allocation6], 0
    %s26 = scalar_lea.sflag [#allocation6], 1
    %27 = vsyncpa %s26, 0
    %28 = vsyncpa [#allocation7], 0
    %s29 = scalar_lea.sflag [#allocation7], 1
    %30 = vsyncpa %s29, 0
    %31 = vsyncpa [#allocation12], 0
    %s32 = scalar_lea.sflag [#allocation12], 1
    %33 = vsyncpa %s32, 0
    loop: start=0, step=1, limit=8
    $region2: #{tpu_custom_call.1} parent=1 // loop_pre_header
      _
    $region3: #{tpu_custom_call.1} parent=1 // loop_header
      %s35 = sphi 0, %s39
      %p36 = scmp.ge.s32.totalorder %s35, 8
      %s42 = sphi 0, %s54
      %s43 = sphi 0, %s50
      %s44 = sphi 0, %s42
      %s45 = sphi 0, %s43
      %s46 = sphi 0, %s44
      %s47 = sphi 0, %s45
      %s55 = sphi 0, %s55
      %s57 = sphi 0, %s55
      %s58 = sphi 0, %s57
      %s72 = sphi 0, %s58
      %s82 = sphi 0, %s84
      %s85 = sphi 0, %s82
      %s86 = sphi 0, %s85
      %s102 = sphi 0, %s86
      %s112 = sphi 0, %s114
      %s115 = sphi 0, %s112
      %s116 = sphi 0, %s115
      %s132 = sphi 0, %s116
      %s144 = sphi 0, %s146
      %s147 = sphi 0, %s144
      %s148 = sphi 0, %s147
      %s164 = sphi 0, %s148
      %s174 = sphi 0, %s176
      %s177 = sphi 0, %s174
      %s178 = sphi 0, %s177
      %s194 = sphi 0, %s178
      %s200 = sphi 0, %s202
      %s203 = sphi 0, %s200
      %s204 = sphi 0, %s203
      %s220 = sphi 0, %s204
      %s226 = sphi 0, %s228
      %s229 = sphi 0, %s226
      %s230 = sphi 0, %s229
      %s246 = sphi 0, %s230
    $region4: #{tpu_custom_call.1} parent=1 // loop_header_branch
      %38 = sbr.rel (%p36) target = $region8
    $region5: #{tpu_custom_call.1} parent=1 // loop_body
      %s40 = ssub.s32 %s35, 1
      %s41 = ssub.s32 %s35, 2
      %s48 = sadd.s32 1, %s43
      %p49 = scmp.ge.s32.totalorder %s48, 3
      %s50 = scalar_select %p49, 0, %s48
      %s51 = sadd.s32 1, %s42
      %s52 = scalar_select %p49, %s51, %s42
      %p53 = scmp.ge.s32.totalorder %s52, 2
      %s54 = scalar_select %p53, 0, %s52
      %s56 = sadd.s32 %s55, 1
      %p59 = scmp.eq.s32.totalorder %s35, 5
      %p60 = scmp.ne.s32.totalorder %s55, %s57
      %p61 = scmp.eq.s32.totalorder %s35, 0
      %p62 = por %p60, %p61
      %p63 = scmp.ne.s32.totalorder %s55, %s57
      %p64 = scmp.eq.s32.totalorder %s40, 5
      %p65 = por %p63, %p64
      %p66 = scmp.ne.s32.totalorder %s57, %s58
      %p67 = scmp.eq.s32.totalorder %s40, 0
      %p68 = por %p66, %p67
      %p69 = scmp.ne.s32.totalorder %s57, %s58
      %p70 = scmp.eq.s32.totalorder %s41, 5
      %p71 = por %p69, %p70
      %p73 = scmp.ne.s32.totalorder %s58, %s72
      %p74 = scmp.eq.s32.totalorder %s41, 0
      %p75 = por %p73, %p74
      %s76 = smul.u32 %s42, 3
      %s77 = sadd.s32 %s76, %s43
      %s78 = smul.u32 %s54, 3
      %s79 = sadd.s32 %s78, %s50
      %s80 = ssub.s32 %s77, %s79
      %p81 = scmp.eq.s32.totalorder %s80, 0
      %s83 = sadd.s32 %s82, 1
      %s84 = scalar_select %p81, %s82, %s83
      %p87 = pneg %p81
      %p88 = scmp.eq.s32.totalorder %s35, 5
      %p89 = por %p87, %p88
      %p90 = scmp.ne.s32.totalorder %s82, %s85
      %p91 = scmp.eq.s32.totalorder %s35, 0
      %p92 = por %p90, %p91
      %p93 = scmp.ne.s32.totalorder %s82, %s85
      %p94 = scmp.eq.s32.totalorder %s40, 5
      %p95 = por %p93, %p94
      %p96 = scmp.ne.s32.totalorder %s85, %s86
      %p97 = scmp.eq.s32.totalorder %s40, 0
      %p98 = por %p96, %p97
      %p99 = scmp.ne.s32.totalorder %s85, %s86
      %p100 = scmp.eq.s32.totalorder %s41, 5
      %p101 = por %p99, %p100
      %p103 = scmp.ne.s32.totalorder %s86, %s102
      %p104 = scmp.eq.s32.totalorder %s41, 0
      %p105 = por %p103, %p104
      %s106 = smul.u32 %s42, 3
      %s107 = sadd.s32 %s106, %s43
      %s108 = smul.u32 %s54, 3
      %s109 = sadd.s32 %s108, %s50
      %s110 = ssub.s32 %s107, %s109
      %p111 = scmp.eq.s32.totalorder %s110, 0
      %s113 = sadd.s32 %s112, 1
      %s114 = scalar_select %p111, %s112, %s113
      %p117 = pneg %p111
      %p118 = scmp.eq.s32.totalorder %s35, 5
      %p119 = por %p117, %p118
      %p120 = scmp.ne.s32.totalorder %s112, %s115
      %p121 = scmp.eq.s32.totalorder %s35, 0
      %p122 = por %p120, %p121
      %p123 = scmp.ne.s32.totalorder %s112, %s115
      %p124 = scmp.eq.s32.totalorder %s40, 5
      %p125 = por %p123, %p124
      %p126 = scmp.ne.s32.totalorder %s115, %s116
      %p127 = scmp.eq.s32.totalorder %s40, 0
      %p128 = por %p126, %p127
      %p129 = scmp.ne.s32.totalorder %s115, %s116
      %p130 = scmp.eq.s32.totalorder %s41, 5
      %p131 = por %p129, %p130
      %p133 = scmp.ne.s32.totalorder %s116, %s132
      %p134 = scmp.eq.s32.totalorder %s41, 0
      %p135 = por %p133, %p134
      %s136 = smul.u32 %s42, 3
      %s137 = sadd.s32 %s136, %s43
      %s138 = sld [smem:[#allocation4 + %s137]]
      %s139 = smul.u32 %s54, 3
      %s140 = sadd.s32 %s139, %s50
      %s141 = sld [smem:[#allocation4 + %s140]]
      %s142 = ssub.s32 %s138, %s141
      %p143 = scmp.eq.s32.totalorder %s142, 0
      %s145 = sadd.s32 %s144, 1
      %s146 = scalar_select %p143, %s144, %s145
      %p149 = pneg %p143
      %p150 = scmp.eq.s32.totalorder %s35, 5
      %p151 = por %p149, %p150
      %p152 = scmp.ne.s32.totalorder %s144, %s147
      %p153 = scmp.eq.s32.totalorder %s35, 0
      %p154 = por %p152, %p153
      %p155 = scmp.ne.s32.totalorder %s144, %s147
      %p156 = scmp.eq.s32.totalorder %s40, 5
      %p157 = por %p155, %p156
      %p158 = scmp.ne.s32.totalorder %s147, %s148
      %p159 = scmp.eq.s32.totalorder %s40, 0
      %p160 = por %p158, %p159
      %p161 = scmp.ne.s32.totalorder %s147, %s148
      %p162 = scmp.eq.s32.totalorder %s41, 5
      %p163 = por %p161, %p162
      %p165 = scmp.ne.s32.totalorder %s148, %s164
      %p166 = scmp.eq.s32.totalorder %s41, 0
      %p167 = por %p165, %p166
      %s168 = smul.u32 %s42, 3
      %s169 = sadd.s32 %s168, %s43
      %s170 = smul.u32 %s54, 3
      %s171 = sadd.s32 %s170, %s50
      %s172 = ssub.s32 %s169, %s171
      %p173 = scmp.eq.s32.totalorder %s172, 0
      %s175 = sadd.s32 %s174, 1
      %s176 = scalar_select %p173, %s174, %s175
      %p179 = pneg %p173
      %p180 = scmp.eq.s32.totalorder %s35, 5
      %p181 = por %p179, %p180
      %p182 = scmp.ne.s32.totalorder %s174, %s177
      %p183 = scmp.eq.s32.totalorder %s35, 0
      %p184 = por %p182, %p183
      %p185 = scmp.ne.s32.totalorder %s174, %s177
      %p186 = scmp.eq.s32.totalorder %s40, 5
      %p187 = por %p185, %p186
      %p188 = scmp.ne.s32.totalorder %s177, %s178
      %p189 = scmp.eq.s32.totalorder %s40, 0
      %p190 = por %p188, %p189
      %p191 = scmp.ne.s32.totalorder %s177, %s178
      %p192 = scmp.eq.s32.totalorder %s41, 5
      %p193 = por %p191, %p192
      %p195 = scmp.ne.s32.totalorder %s178, %s194
      %p196 = scmp.eq.s32.totalorder %s41, 0
      %p197 = por %p195, %p196
      %s198 = ssub.s32 %s42, %s54
      %p199 = scmp.eq.s32.totalorder %s198, 0
      %s201 = sadd.s32 %s200, 1
      %s202 = scalar_select %p199, %s200, %s201
      %p205 = pneg %p199
      %p206 = scmp.eq.s32.totalorder %s35, 5
      %p207 = por %p205, %p206
      %p208 = scmp.ne.s32.totalorder %s200, %s203
      %p209 = scmp.eq.s32.totalorder %s35, 0
      %p210 = por %p208, %p209
      %p211 = scmp.ne.s32.totalorder %s200, %s203
      %p212 = scmp.eq.s32.totalorder %s40, 5
      %p213 = por %p211, %p212
      %p214 = scmp.ne.s32.totalorder %s203, %s204
      %p215 = scmp.eq.s32.totalorder %s40, 0
      %p216 = por %p214, %p215
      %p217 = scmp.ne.s32.totalorder %s203, %s204
      %p218 = scmp.eq.s32.totalorder %s41, 5
      %p219 = por %p217, %p218
      %p221 = scmp.ne.s32.totalorder %s204, %s220
      %p222 = scmp.eq.s32.totalorder %s41, 0
      %p223 = por %p221, %p222
      %s224 = ssub.s32 %s42, %s54
      %p225 = scmp.eq.s32.totalorder %s224, 0
      %s227 = sadd.s32 %s226, 1
      %s228 = scalar_select %p225, %s226, %s227
      %p231 = pneg %p225
      %p232 = scmp.eq.s32.totalorder %s35, 5
      %p233 = por %p231, %p232
      %p234 = scmp.ne.s32.totalorder %s226, %s229
      %p235 = scmp.eq.s32.totalorder %s35, 0
      %p236 = por %p234, %p235
      %p237 = scmp.ne.s32.totalorder %s226, %s229
      %p238 = scmp.eq.s32.totalorder %s40, 5
      %p239 = por %p237, %p238
      %p240 = scmp.ne.s32.totalorder %s229, %s230
      %p241 = scmp.eq.s32.totalorder %s40, 0
      %p242 = por %p240, %p241
      %p243 = scmp.ne.s32.totalorder %s229, %s230
      %p244 = scmp.eq.s32.totalorder %s41, 5
      %p245 = por %p243, %p244
      %p247 = scmp.ne.s32.totalorder %s230, %s246
      %p248 = scmp.eq.s32.totalorder %s41, 0
      %p249 = por %p247, %p248
      %p250 = scmp.le.s32.totalorder 1, %s35
      %p251 = scmp.lt.s32.totalorder %s35, 7
      %p252 = pnand %p250, %p251
      %p253 = pneg %p252
      // Predicated region
      $region9: #{tpu_custom_call.1} parent=5 // pred_check
        _
      $region10: #{tpu_custom_call.1} parent=5 // pred_check_branch
        %255 = sbr.rel (%p252) target = $region12
      $region11: #{tpu_custom_call.1} parent=5 // pred_region
        %s256 = ssub.s32 %s35, 1
        // Predicated region
        $region13: #{tpu_custom_call.1} parent=11 // pred_check
          %p257 = pneg %p68
        $region14: #{tpu_custom_call.1} parent=11 // pred_check_branch
          %259 = sbr.rel (%p257) target = $region16
        $region15: #{tpu_custom_call.1} parent=11 // pred_region
          %s261 = ssub.s32 16, 16
          %262 = vsyncadd [#allocation8], %s261
          %s264 = sshll.u32 %s2, 4
          %s265 = int_to_ptr.vmem [resolvable:$true] %s264
          %267 = dma.vmem_to_smem %s265, 16, [#allocation5], [#allocation8]
        $region16: #{tpu_custom_call.1} parent=11 // pred_fallthru
          _
      $region12: #{tpu_custom_call.1} parent=5 // pred_fallthru
        _
      %p268 = scmp.lt.s32.totalorder %s35, 6
      // Predicated region
      $region17: #{tpu_custom_call.1} parent=5 // pred_check
        %p269 = pneg %p268
      $region18: #{tpu_custom_call.1} parent=5 // pred_check_branch
        %271 = sbr.rel (%p269) target = $region20
      $region19: #{tpu_custom_call.1} parent=5 // pred_region
        // Predicated region
        $region21: #{tpu_custom_call.1} parent=19 // pred_check
          %p272 = pneg %p92
        $region22: #{tpu_custom_call.1} parent=19 // pred_check_branch
          %274 = sbr.rel (%p272) target = $region24
        $region23: #{tpu_custom_call.1} parent=19 // pred_region
          %s275 = smul.u32 %s42, 3
          %s276 = sadd.s32 %s275, %s43
          %s277 = smul.u32 8, %s276
          %p278 = scmp.lt.s32.totalorder %s277, 47
          %s279 = scalar_select %p278, %s277, 47
          %s280 = smul.addr %s279, 8
          %s281 = scalar_lea.vmem %s3, %s280
          %s282 = smul.u32 %s42, 3
          %s283 = sadd.s32 %s282, %s43
          %s284 = smul.u32 8, %s283
        $region24: #{tpu_custom_call.1} parent=19 // pred_fallthru
          _
        // Predicated region
        $region25: #{tpu_custom_call.1} parent=19 // pred_check
          %p285 = pneg %p122
        $region26: #{tpu_custom_call.1} parent=19 // pred_check_branch
          %287 = sbr.rel (%p285) target = $region28
        $region27: #{tpu_custom_call.1} parent=19 // pred_region
          %s288 = sand.u32 %s112, 1
          %s289 = scalar_lea.sflag [#allocation6], %s288
          %s290 = sand.u32 %s112, 1
          %s291 = smul.addr %s290, 64
          %s292 = scalar_lea.vmem [#allocation9], %s291
          %s293 = smul.u32 %s42, 3
          %s294 = sadd.s32 %s293, %s43
          %s295 = smul.u32 8, %s294
          %s297 = ssub.s32 1024, 1024
          %298 = vsyncadd %s289, %s297
          %s299 = smul.addr %s295, 128
          %s300 = scalar_lea.hbm %s4, %s299
          %s301 = sshll.u32 %s292, 4
          %s302 = int_to_ptr.vmem [resolvable:$true] %s301
          %307 = dma.hbm_to_vmem [thread:$0]  %s300, 1024, %s302, %s289, 128, 128, 8
        $region28: #{tpu_custom_call.1} parent=19 // pred_fallthru
          _
        // Predicated region
        $region29: #{tpu_custom_call.1} parent=19 // pred_check
          %p308 = pneg %p154
        $region30: #{tpu_custom_call.1} parent=19 // pred_check_branch
          %310 = sbr.rel (%p308) target = $region32
        $region31: #{tpu_custom_call.1} parent=19 // pred_region
          %s311 = smul.u32 %s42, 3
          %s312 = sadd.s32 %s311, %s43
          %s313 = sld [smem:[#allocation4 + %s312]]
          %p314 = scmp.lt.s32.totalorder %s313, 2
          %s315 = scalar_select %p314, %s313, 2
          %s316 = scalar_lea.vmem %s5, %s315
          %s317 = smul.u32 %s42, 3
          %s318 = sadd.s32 %s317, %s43
          %s319 = sld [smem:[#allocation4 + %s318]]
        $region32: #{tpu_custom_call.1} parent=19 // pred_fallthru
          _
        // Predicated region
        $region33: #{tpu_custom_call.1} parent=19 // pred_check
          %p320 = pneg %p184
        $region34: #{tpu_custom_call.1} parent=19 // pred_check_branch
          %322 = sbr.rel (%p320) target = $region36
        $region35: #{tpu_custom_call.1} parent=19 // pred_region
          %s323 = smul.u32 %s42, 3
          %s324 = sadd.s32 %s323, %s43
          %s325 = smul.u32 8, %s324
          %p326 = scmp.lt.s32.totalorder %s325, 47
          %s327 = scalar_select %p326, %s325, 47
          %s328 = smul.addr %s327, 8
          %s329 = scalar_lea.vmem %s6, %s328
          %s330 = smul.u32 %s42, 3
          %s331 = sadd.s32 %s330, %s43
          %s332 = smul.u32 8, %s331
        $region36: #{tpu_custom_call.1} parent=19 // pred_fallthru
          _
      $region20: #{tpu_custom_call.1} parent=5 // pred_fallthru
        _
      %p333 = scmp.le.s32.totalorder 1, %s35
      %p334 = scmp.lt.s32.totalorder %s35, 7
      %p335 = pnand %p333, %p334
      %p336 = pneg %p335
      // Predicated region
      $region37: #{tpu_custom_call.1} parent=5 // pred_check
        _
      $region38: #{tpu_custom_call.1} parent=5 // pred_check_branch
        %338 = sbr.rel (%p335) target = $region40
      $region39: #{tpu_custom_call.1} parent=5 // pred_region
        %s339 = ssub.s32 %s35, 1
        // Predicated region
        $region41: #{tpu_custom_call.1} parent=39 // pred_check
          %p340 = pneg %p68
        $region42: #{tpu_custom_call.1} parent=39 // pred_check_branch
          %342 = sbr.rel (%p340) target = $region44
        $region43: #{tpu_custom_call.1} parent=39 // pred_region
          %343 = dma.done [#allocation8], 16
        $region44: #{tpu_custom_call.1} parent=39 // pred_fallthru
          _
        %s344 = sand.u32 %s115, 1
        %s345 = scalar_lea.sflag [#allocation6], %s344
        %s346 = sand.u32 %s115, 1
        %s347 = smul.addr %s346, 64
        %s348 = scalar_lea.vmem [#allocation9], %s347
        // Predicated region
        $region45: #{tpu_custom_call.1} parent=39 // pred_check
          %p349 = pneg %p128
        $region46: #{tpu_custom_call.1} parent=39 // pred_check_branch
          %351 = sbr.rel (%p349) target = $region48
        $region47: #{tpu_custom_call.1} parent=39 // pred_region
          %352 = dma.done %s345, 1024
        $region48: #{tpu_custom_call.1} parent=39 // pred_fallthru
          _
        %353 = sfence
        %p354 = pneg %p68
        %p355 = pneg %p65
        %s356 = smul.u32 %s44, 3
        %s357 = sadd.s32 %s356, %s45
        %s358 = smul.u32 8, %s357
        %p359 = scmp.lt.s32.totalorder %s358, 47
        %s360 = scalar_select %p359, %s358, 47
        %s361 = smul.addr %s360, 8
        %s362 = scalar_lea.vmem %s3, %s361
        %p363 = pneg %p98
        %p364 = pneg %p95
        %s365 = sand.u32 %s115, 1
        %s366 = scalar_lea.sflag [#allocation6], %s365
        %s367 = sand.u32 %s115, 1
        %s368 = smul.addr %s367, 64
        %s369 = scalar_lea.vmem [#allocation9], %s368
        %p370 = pneg %p128
        %p371 = pneg %p125
        %s372 = smul.u32 %s44, 3
        %s373 = sadd.s32 %s372, %s45
        %s374 = sld [smem:[#allocation4 + %s373]]
        %p375 = scmp.lt.s32.totalorder %s374, 2
        %s376 = scalar_select %p375, %s374, 2
        %s377 = scalar_lea.vmem %s5, %s376
        %p378 = pneg %p160
        %p379 = pneg %p157
        %s380 = smul.u32 %s44, 3
        %s381 = sadd.s32 %s380, %s45
        %s382 = smul.u32 8, %s381
        %p383 = scmp.lt.s32.totalorder %s382, 47
        %s384 = scalar_select %p383, %s382, 47
        %s385 = smul.addr %s384, 8
        %s386 = scalar_lea.vmem %s6, %s385
        %p387 = pneg %p190
        %p388 = pneg %p187
        %p389 = pneg %p216
        %p390 = pneg %p213
        %s391 = sand.u32 %s203, 1
        %s392 = scalar_lea.sflag [#allocation7], %s391
        %s393 = sand.u32 %s203, 1
        %s394 = smul.addr %s393, 8
        %s395 = scalar_lea.vmem [#allocation10], %s394
        %p396 = pneg %p242
        %p397 = pneg %p239
        %s398 = sand.u32 %s229, 1
        %s399 = scalar_lea.sflag [#allocation12], %s398
        %s400 = sand.u32 %s229, 1
        %s401 = smul.addr %s400, 8
        %s402 = scalar_lea.vmem [#allocation11], %s401
        %s403 = smul.u32 %s44, 3
        %s404 = sadd.s32 %s403, %s45
        %s405 = smul.u32 8, %s404
        %p406 = scmp.lt.s32.totalorder %s405, 47
        %s407 = scalar_select %p406, %s405, 47
        %s408 = smul.addr %s407, 8
        %s409 = scalar_lea.vmem %s3, %s408
        %s410 = smul.u32 %s44, 3
        %s411 = sadd.s32 %s410, %s45
        %s412 = smul.u32 8, %s411
        %s413 = smul.u32 %s44, 3
        %s414 = sadd.s32 %s413, %s45
        %s415 = smul.u32 8, %s414
        %s416 = smul.u32 %s44, 3
        %s417 = sadd.s32 %s416, %s45
        %s418 = sld [smem:[#allocation4 + %s417]]
        %p419 = scmp.lt.s32.totalorder %s418, 2
        %s420 = scalar_select %p419, %s418, 2
        %s421 = scalar_lea.vmem %s5, %s420
        %s422 = smul.u32 %s44, 3
        %s423 = sadd.s32 %s422, %s45
        %s424 = sld [smem:[#allocation4 + %s423]]
        %s425 = smul.u32 %s44, 3
        %s426 = sadd.s32 %s425, %s45
        %s427 = smul.u32 8, %s426
        %p428 = scmp.lt.s32.totalorder %s427, 47
        %s429 = scalar_select %p428, %s427, 47
        %s430 = smul.addr %s429, 8
        %s431 = scalar_lea.vmem %s6, %s430
        %s432 = smul.u32 %s44, 3
        %s433 = sadd.s32 %s432, %s45
        %s434 = smul.u32 8, %s433
        %p435 = scmp.eq.s32.totalorder %s45, 0
        // Predicated region
        $region49: #{tpu_custom_call.1} parent=39 // pred_check
          %p436 = pneg %p435
        $region50: #{tpu_custom_call.1} parent=39 // pred_check_branch
          %438 = sbr.rel (%p436) target = $region52
        $region51: #{tpu_custom_call.1} parent=39 // pred_region
          %439 = vst [vmem:[%s395] sm:$0xff] 0.0
          %440 = vst [vmem:[%s402] sm:$0xff] 0.0
        $region52: #{tpu_custom_call.1} parent=39 // pred_fallthru
          _
        %s441 = sld [smem:[#allocation5]]
        %s442 = sld [smem:[#allocation5 + $0x1]]
        %s443 = smul.u32 %s44, 3
        %s444 = sadd.s32 %s443, %s45
        %s445 = sld [smem:[#allocation3 + %s444]]
        %v446 = vld [vmem:[%s409] sm:$0xff]
        %v447 = vld [vmem:[%s409 + $0x8] sm:$0xff]
        %v448 = vld [vmem:[%s409 + $0x10] sm:$0xff]
        %v449 = vld [vmem:[%s409 + $0x18] sm:$0xff]
        %v450 = vld [vmem:[%s409 + $0x20] sm:$0xff]
        %v451 = vld [vmem:[%s409 + $0x28] sm:$0xff]
        %v452 = vld [vmem:[%s409 + $0x30] sm:$0xff]
        %v453 = vld [vmem:[%s409 + $0x38] sm:$0xff]
        %v454 = vstv %s441
        %v455 = vmul.f32 %v446, %v454
        %v456 = vmul.f32 %v447, %v454
        %v457 = vmul.f32 %v448, %v454
        %v458 = vmul.f32 %v449, %v454
        %v459 = vmul.f32 %v450, %v454
        %v460 = vmul.f32 %v451, %v454
        %v461 = vmul.f32 %v452, %v454
        %v462 = vmul.f32 %v453, %v454
        %v463 = vld [vmem:[%s348] sm:$0xff]
        %v464 = vld [vmem:[%s348 + $0x8] sm:$0xff]
        %v465 = vld [vmem:[%s348 + $0x10] sm:$0xff]
        %v466 = vld [vmem:[%s348 + $0x18] sm:$0xff]
        %v467 = vld [vmem:[%s348 + $0x20] sm:$0xff]
        %v468 = vld [vmem:[%s348 + $0x28] sm:$0xff]
        %v469 = vld [vmem:[%s348 + $0x30] sm:$0xff]
        %v470 = vld [vmem:[%s348 + $0x38] sm:$0xff]
        %v471 = vld [vmem:[%s421] sm:$0x1]
        %v473 = vlaneseq
        %v474 = vshrl.u32 %v473, 7
        %v475 = vsub.s32 0, %v474
        %v476 = vrot.slane %v471, %v475
        %v478 = vsub.f32 %v463, %v476
        %v479 = vsub.f32 %v464, %v476
        %v480 = vsub.f32 %v465, %v476
        %v481 = vsub.f32 %v466, %v476
        %v482 = vsub.f32 %v467, %v476
        %v483 = vsub.f32 %v468, %v476
        %v484 = vsub.f32 %v469, %v476
        %v485 = vsub.f32 %v470, %v476
        %v486 = vstv %s442
        %v487 = vmul.f32 %v478, %v486
        %v488 = vmul.f32 %v479, %v486
        %v489 = vmul.f32 %v480, %v486
        %v490 = vmul.f32 %v481, %v486
        %v491 = vmul.f32 %v482, %v486
        %v492 = vmul.f32 %v483, %v486
        %v493 = vmul.f32 %v484, %v486
        %v494 = vmul.f32 %v485, %v486
        %v495 = vld [vmem:[%s431] sm:$0xff]
        %v496 = vld [vmem:[%s431 + $0x8] sm:$0xff]
        %v497 = vld [vmem:[%s431 + $0x10] sm:$0xff]
        %v498 = vld [vmem:[%s431 + $0x18] sm:$0xff]
        %v499 = vld [vmem:[%s431 + $0x20] sm:$0xff]
        %v500 = vld [vmem:[%s431 + $0x28] sm:$0xff]
        %v501 = vld [vmem:[%s431 + $0x30] sm:$0xff]
        %v502 = vld [vmem:[%s431 + $0x38] sm:$0xff]
        %503 = vmax.xlane.f32.xlu0 %v487
        %v504 = vpop.xlane.xlu0 %503
        %505 = vmax.xlane.f32.xlu0 %v488
        %v506 = vpop.xlane.xlu0 %505
        %507 = vmax.xlane.f32.xlu0 %v489
        %v508 = vpop.xlane.xlu0 %507
        %509 = vmax.xlane.f32.xlu0 %v490
        %v510 = vpop.xlane.xlu0 %509
        %511 = vmax.xlane.f32.xlu0 %v491
        %v512 = vpop.xlane.xlu0 %511
        %513 = vmax.xlane.f32.xlu0 %v492
        %v514 = vpop.xlane.xlu0 %513
        %515 = vmax.xlane.f32.xlu0 %v493
        %v516 = vpop.xlane.xlu0 %515
        %517 = vmax.xlane.f32.xlu0 %v494
        %v518 = vpop.xlane.xlu0 %517
        %v519 = vsub.f32 %v487, %v504
        %v520 = vsub.f32 %v488, %v506
        %v521 = vsub.f32 %v489, %v508
        %v522 = vsub.f32 %v490, %v510
        %v523 = vsub.f32 %v491, %v512
        %v524 = vsub.f32 %v492, %v514
        %v525 = vsub.f32 %v493, %v516
        %v526 = vsub.f32 %v494, %v518
        %v527 = vmul.f32 %v519, 1.442695
        %v528 = vpow.pop %v527
        %v529 = vmul.f32 %v520, 1.442695
        %v530 = vpow.pop %v529
        %v531 = vmul.f32 %v521, 1.442695
        %v532 = vpow.pop %v531
        %v533 = vmul.f32 %v522, 1.442695
        %v534 = vpow.pop %v533
        %v535 = vmul.f32 %v523, 1.442695
        %v536 = vpow.pop %v535
        %v537 = vmul.f32 %v524, 1.442695
        %v538 = vpow.pop %v537
        %v539 = vmul.f32 %v525, 1.442695
        %v540 = vpow.pop %v539
        %v541 = vmul.f32 %v526, 1.442695
        %v542 = vpow.pop %v541
        %543 = vadd.xlane.f32.xlu0 %v528
        %v544 = vpop.xlane.xlu0 %543
        %545 = vadd.xlane.f32.xlu0 %v530
        %v546 = vpop.xlane.xlu0 %545
        %547 = vadd.xlane.f32.xlu0 %v532
        %v548 = vpop.xlane.xlu0 %547
        %549 = vadd.xlane.f32.xlu0 %v534
        %v550 = vpop.xlane.xlu0 %549
        %551 = vadd.xlane.f32.xlu0 %v536
        %v552 = vpop.xlane.xlu0 %551
        %553 = vadd.xlane.f32.xlu0 %v538
        %v554 = vpop.xlane.xlu0 %553
        %555 = vadd.xlane.f32.xlu0 %v540
        %v556 = vpop.xlane.xlu0 %555
        %557 = vadd.xlane.f32.xlu0 %v542
        %v558 = vpop.xlane.xlu0 %557
        %vm559 = vcmp.ne.f32.partialorder %v495, 0.0
        %vm560 = vcmp.ne.f32.partialorder %v496, 0.0
        %vm561 = vcmp.ne.f32.partialorder %v497, 0.0
        %vm562 = vcmp.ne.f32.partialorder %v498, 0.0
        %vm563 = vcmp.ne.f32.partialorder %v499, 0.0
        %vm564 = vcmp.ne.f32.partialorder %v500, 0.0
        %vm565 = vcmp.ne.f32.partialorder %v501, 0.0
        %vm566 = vcmp.ne.f32.partialorder %v502, 0.0
        %v567 = vsel %vm559, 1, 0
        %v568 = vsel %vm560, 1, 0
        %v569 = vsel %vm561, 1, 0
        %v570 = vsel %vm562, 1, 0
        %v571 = vsel %vm563, 1, 0
        %v572 = vsel %vm564, 1, 0
        %v573 = vsel %vm565, 1, 0
        %v574 = vsel %vm566, 1, 0
        %575 = vset.pattern.permute.xlu0 0
        %576 = vperm.xlu0 %575, %v567
        %v577 = vpop.permute.xlu0 %576
        %578 = vset.pattern.permute.xlu0 0
        %579 = vperm.xlu0 %578, %v568
        %v580 = vpop.permute.xlu0 %579
        %581 = vset.pattern.permute.xlu0 0
        %582 = vperm.xlu0 %581, %v569
        %v583 = vpop.permute.xlu0 %582
        %584 = vset.pattern.permute.xlu0 0
        %585 = vperm.xlu0 %584, %v570
        %v586 = vpop.permute.xlu0 %585
        %587 = vset.pattern.permute.xlu0 0
        %588 = vperm.xlu0 %587, %v571
        %v589 = vpop.permute.xlu0 %588
        %590 = vset.pattern.permute.xlu0 0
        %591 = vperm.xlu0 %590, %v572
        %v592 = vpop.permute.xlu0 %591
        %593 = vset.pattern.permute.xlu0 0
        %594 = vperm.xlu0 %593, %v573
        %v595 = vpop.permute.xlu0 %594
        %596 = vset.pattern.permute.xlu0 0
        %597 = vperm.xlu0 %596, %v574
        %v598 = vpop.permute.xlu0 %597
        %vm599 = vcmp.eq.s32.totalorder %v577, 1
        %vm600 = vcmp.eq.s32.totalorder %v580, 1
        %vm601 = vcmp.eq.s32.totalorder %v583, 1
        %vm602 = vcmp.eq.s32.totalorder %v586, 1
        %vm603 = vcmp.eq.s32.totalorder %v589, 1
        %vm604 = vcmp.eq.s32.totalorder %v592, 1
        %vm605 = vcmp.eq.s32.totalorder %v595, 1
        %vm606 = vcmp.eq.s32.totalorder %v598, 1
        %v607 = vsel %vm599, %v455, 1e-09
        %v608 = vsel %vm600, %v456, 1e-09
        %v609 = vsel %vm601, %v457, 1e-09
        %v610 = vsel %vm602, %v458, 1e-09
        %v611 = vsel %vm603, %v459, 1e-09
        %v612 = vsel %vm604, %v460, 1e-09
        %v613 = vsel %vm605, %v461, 1e-09
        %v614 = vsel %vm606, %v462, 1e-09
        %615 = vmax.xlane.f32.xlu0 %v607
        %v616 = vpop.xlane.xlu0 %615
        %617 = vmax.xlane.f32.xlu0 %v608
        %v618 = vpop.xlane.xlu0 %617
        %619 = vmax.xlane.f32.xlu0 %v609
        %v620 = vpop.xlane.xlu0 %619
        %621 = vmax.xlane.f32.xlu0 %v610
        %v622 = vpop.xlane.xlu0 %621
        %623 = vmax.xlane.f32.xlu0 %v611
        %v624 = vpop.xlane.xlu0 %623
        %625 = vmax.xlane.f32.xlu0 %v612
        %v626 = vpop.xlane.xlu0 %625
        %627 = vmax.xlane.f32.xlu0 %v613
        %v628 = vpop.xlane.xlu0 %627
        %629 = vmax.xlane.f32.xlu0 %v614
        %v630 = vpop.xlane.xlu0 %629
        %v631 = vsub.f32 %v607, %v616
        %v632 = vsub.f32 %v608, %v618
        %v633 = vsub.f32 %v609, %v620
        %v634 = vsub.f32 %v610, %v622
        %v635 = vsub.f32 %v611, %v624
        %v636 = vsub.f32 %v612, %v626
        %v637 = vsub.f32 %v613, %v628
        %v638 = vsub.f32 %v614, %v630
        %v639 = vmul.f32 %v631, 1.442695
        %v640 = vpow.pop %v639
        %v641 = vmul.f32 %v632, 1.442695
        %v642 = vpow.pop %v641
        %v643 = vmul.f32 %v633, 1.442695
        %v644 = vpow.pop %v643
        %v645 = vmul.f32 %v634, 1.442695
        %v646 = vpow.pop %v645
        %v647 = vmul.f32 %v635, 1.442695
        %v648 = vpow.pop %v647
        %v649 = vmul.f32 %v636, 1.442695
        %v650 = vpow.pop %v649
        %v651 = vmul.f32 %v637, 1.442695
        %v652 = vpow.pop %v651
        %v653 = vmul.f32 %v638, 1.442695
        %v654 = vpow.pop %v653
        %655 = vadd.xlane.f32.xlu0 %v640
        %v656 = vpop.xlane.xlu0 %655
        %657 = vadd.xlane.f32.xlu0 %v642
        %v658 = vpop.xlane.xlu0 %657
        %659 = vadd.xlane.f32.xlu0 %v644
        %v660 = vpop.xlane.xlu0 %659
        %661 = vadd.xlane.f32.xlu0 %v646
        %v662 = vpop.xlane.xlu0 %661
        %663 = vadd.xlane.f32.xlu0 %v648
        %v664 = vpop.xlane.xlu0 %663
        %665 = vadd.xlane.f32.xlu0 %v650
        %v666 = vpop.xlane.xlu0 %665
        %667 = vadd.xlane.f32.xlu0 %v652
        %v668 = vpop.xlane.xlu0 %667
        %669 = vadd.xlane.f32.xlu0 %v654
        %v670 = vpop.xlane.xlu0 %669
        %v671 = vlog2.pop %v656
        %v672 = vmul.f32 %v671, 0.6931472
        %v673 = vlog2.pop %v658
        %v674 = vmul.f32 %v673, 0.6931472
        %v675 = vlog2.pop %v660
        %v676 = vmul.f32 %v675, 0.6931472
        %v677 = vlog2.pop %v662
        %v678 = vmul.f32 %v677, 0.6931472
        %v679 = vlog2.pop %v664
        %v680 = vmul.f32 %v679, 0.6931472
        %v681 = vlog2.pop %v666
        %v682 = vmul.f32 %v681, 0.6931472
        %v683 = vlog2.pop %v668
        %v684 = vmul.f32 %v683, 0.6931472
        %v685 = vlog2.pop %v670
        %v686 = vmul.f32 %v685, 0.6931472
        %v687 = vsub.f32 %v631, %v672
        %v688 = vsub.f32 %v632, %v674
        %v689 = vsub.f32 %v633, %v676
        %v690 = vsub.f32 %v634, %v678
        %v691 = vsub.f32 %v635, %v680
        %v692 = vsub.f32 %v636, %v682
        %v693 = vsub.f32 %v637, %v684
        %v694 = vsub.f32 %v638, %v686
        %v695 = vsub.f32 0.0, %v528
        %v696 = vsub.f32 0.0, %v530
        %v697 = vsub.f32 0.0, %v532
        %v698 = vsub.f32 0.0, %v534
        %v699 = vsub.f32 0.0, %v536
        %v700 = vsub.f32 0.0, %v538
        %v701 = vsub.f32 0.0, %v540
        %v702 = vsub.f32 0.0, %v542
        %v703 = vmul.f32 %v695, %v687
        %v704 = vmul.f32 %v696, %v688
        %v705 = vmul.f32 %v697, %v689
        %v706 = vmul.f32 %v698, %v690
        %v707 = vmul.f32 %v699, %v691
        %v708 = vmul.f32 %v700, %v692
        %v709 = vmul.f32 %v701, %v693
        %v710 = vmul.f32 %v702, %v694
        %711 = vadd.xlane.f32.xlu0 %v703
        %v712 = vpop.xlane.xlu0 %711
        %713 = vadd.xlane.f32.xlu0 %v704
        %v714 = vpop.xlane.xlu0 %713
        %715 = vadd.xlane.f32.xlu0 %v705
        %v716 = vpop.xlane.xlu0 %715
        %717 = vadd.xlane.f32.xlu0 %v706
        %v718 = vpop.xlane.xlu0 %717
        %719 = vadd.xlane.f32.xlu0 %v707
        %v720 = vpop.xlane.xlu0 %719
        %721 = vadd.xlane.f32.xlu0 %v708
        %v722 = vpop.xlane.xlu0 %721
        %723 = vadd.xlane.f32.xlu0 %v709
        %v724 = vpop.xlane.xlu0 %723
        %725 = vadd.xlane.f32.xlu0 %v710
        %v726 = vpop.xlane.xlu0 %725
        %v727 = vrcp.pop %v544
        %v728 = vrcp.pop %v546
        %v729 = vrcp.pop %v548
        %v730 = vrcp.pop %v550
        %v731 = vrcp.pop %v552
        %v732 = vrcp.pop %v554
        %v733 = vrcp.pop %v556
        %v734 = vrcp.pop %v558
        %v735 = vmul.f32 %v544, %v727
        %v736 = vmul.f32 %v546, %v728
        %v737 = vmul.f32 %v548, %v729
        %v738 = vmul.f32 %v550, %v730
        %v739 = vmul.f32 %v552, %v731
        %v740 = vmul.f32 %v554, %v732
        %v741 = vmul.f32 %v556, %v733
        %v742 = vmul.f32 %v558, %v734
        %v743 = vsub.f32 2.0, %v735
        %v744 = vsub.f32 2.0, %v736
        %v745 = vsub.f32 2.0, %v737
        %v746 = vsub.f32 2.0, %v738
        %v747 = vsub.f32 2.0, %v739
        %v748 = vsub.f32 2.0, %v740
        %v749 = vsub.f32 2.0, %v741
        %v750 = vsub.f32 2.0, %v742
        %v751 = vmul.f32 %v727, %v743
        %v752 = vmul.f32 %v728, %v744
        %v753 = vmul.f32 %v729, %v745
        %v754 = vmul.f32 %v730, %v746
        %v755 = vmul.f32 %v731, %v747
        %v756 = vmul.f32 %v732, %v748
        %v757 = vmul.f32 %v733, %v749
        %v758 = vmul.f32 %v734, %v750
        %v759 = vmul.f32 %v712, %v751
        %v760 = vmul.f32 %v714, %v752
        %v761 = vmul.f32 %v716, %v753
        %v762 = vmul.f32 %v718, %v754
        %v763 = vmul.f32 %v720, %v755
        %v764 = vmul.f32 %v722, %v756
        %v765 = vmul.f32 %v724, %v757
        %v766 = vmul.f32 %v726, %v758
        %v767 = vmul.f32 %v759, %v495
        %v768 = vmul.f32 %v760, %v496
        %v769 = vmul.f32 %v761, %v497
        %v770 = vmul.f32 %v762, %v498
        %v771 = vmul.f32 %v763, %v499
        %v772 = vmul.f32 %v764, %v500
        %v773 = vmul.f32 %v765, %v501
        %v774 = vmul.f32 %v766, %v502
        %vm775 = vcmask 7168
        %v776 = vsel %vm775, %v767, 0.0
        %v777 = vsel %vm775, %v768, 0.0
        %v778 = vadd.f32 %v776, %v777
        %v779 = vsel %vm775, %v769, 0.0
        %v780 = vadd.f32 %v778, %v779
        %v781 = vsel %vm775, %v770, 0.0
        %v782 = vadd.f32 %v780, %v781
        %v783 = vsel %vm775, %v771, 0.0
        %v784 = vadd.f32 %v782, %v783
        %v785 = vsel %vm775, %v772, 0.0
        %v786 = vadd.f32 %v784, %v785
        %v787 = vsel %vm775, %v773, 0.0
        %v788 = vadd.f32 %v786, %v787
        %v789 = vsel %vm775, %v774, 0.0
        %v790 = vadd.f32 %v788, %v789
        %791 = vadd.xlane.f32.xlu0 %v790
        %v792 = vpop.xlane.xlu0 %791
        %v793 = vrot.slane %v792, 4
        %v794 = vadd.f32 %v792, %v793
        %v795 = vrot.slane %v794, 2
        %v796 = vadd.f32 %v794, %v795
        %v797 = vrot.slane %v796, 1
        %v798 = vadd.f32 %v796, %v797
        %s799 = vtos %v798
        %v800 = vsel %vm775, %v495, 0.0
        %v801 = vsel %vm775, %v496, 0.0
        %v802 = vadd.f32 %v800, %v801
        %v803 = vsel %vm775, %v497, 0.0
        %v804 = vadd.f32 %v802, %v803
        %v805 = vsel %vm775, %v498, 0.0
        %v806 = vadd.f32 %v804, %v805
        %v807 = vsel %vm775, %v499, 0.0
        %v808 = vadd.f32 %v806, %v807
        %v809 = vsel %vm775, %v500, 0.0
        %v810 = vadd.f32 %v808, %v809
        %v811 = vsel %vm775, %v501, 0.0
        %v812 = vadd.f32 %v810, %v811
        %v813 = vsel %vm775, %v502, 0.0
        %v814 = vadd.f32 %v812, %v813
        %815 = vadd.xlane.f32.xlu0 %v814
        %v816 = vpop.xlane.xlu0 %815
        %v817 = vrot.slane %v816, 4
        %v818 = vadd.f32 %v816, %v817
        %v819 = vrot.slane %v818, 2
        %v820 = vadd.f32 %v818, %v819
        %v821 = vrot.slane %v820, 1
        %v822 = vadd.f32 %v820, %v821
        %s823 = vtos %v822
        %v824 = vlaneseq
        %v825 = vshrl.u32 %v824, 7
        %v826 = vstv %s445
        %vm827 = vcmp.eq.s32.totalorder %v825, %v826
        %v828 = vld [vmem:[%s395] sm:$0xff]
        %v829 = vstv %s799
        %v830 = vsel %vm827, %v829, 0.0
        %v831 = vadd.f32 %v828, %v830
        %832 = vst [vmem:[%s395] sm:$0xff] %v831
        %v833 = vld [vmem:[%s402] sm:$0xff]
        %v834 = vstv %s823
        %v835 = vsel %vm827, %v834, 0.0
        %v836 = vadd.f32 %v833, %v835
        %837 = vst [vmem:[%s402] sm:$0xff] %v836
        %s838 = sand.u32 %s203, 1
        %s839 = scalar_lea.sflag [#allocation7], %s838
        %s840 = sand.u32 %s203, 1
        %s841 = smul.addr %s840, 8
        %s842 = scalar_lea.vmem [#allocation10], %s841
        %s843 = sand.u32 %s229, 1
        %s844 = scalar_lea.sflag [#allocation12], %s843
        %s845 = sand.u32 %s229, 1
        %s846 = smul.addr %s845, 8
        %s847 = scalar_lea.vmem [#allocation11], %s846
        // Predicated region
        $region53: #{tpu_custom_call.1} parent=39 // pred_check
          %p848 = pneg %p213
        $region54: #{tpu_custom_call.1} parent=39 // pred_check_branch
          %850 = sbr.rel (%p848) target = $region56
        $region55: #{tpu_custom_call.1} parent=39 // pred_region
          %s852 = ssub.s32 128, 128
          %853 = vsyncadd %s839, %s852
          %s854 = smul.addr %s44, 128
          %s855 = scalar_lea.hbm %s7, %s854
          %s857 = sshll.u32 %s842, 4
          %s858 = int_to_ptr.vmem [resolvable:$true] %s857
          %860 = dma.vmem_to_hbm [thread:$0]  %s858, 128, %s855, %s839
        $region56: #{tpu_custom_call.1} parent=39 // pred_fallthru
          _
        // Predicated region
        $region57: #{tpu_custom_call.1} parent=39 // pred_check
          %p861 = pneg %p239
        $region58: #{tpu_custom_call.1} parent=39 // pred_check_branch
          %863 = sbr.rel (%p861) target = $region60
        $region59: #{tpu_custom_call.1} parent=39 // pred_region
          %s865 = ssub.s32 128, 128
          %866 = vsyncadd %s844, %s865
          %s867 = smul.addr %s44, 128
          %s868 = scalar_lea.hbm %s8, %s867
          %s870 = sshll.u32 %s847, 4
          %s871 = int_to_ptr.vmem [resolvable:$true] %s870
          %873 = dma.vmem_to_hbm [thread:$0]  %s871, 128, %s868, %s844
        $region60: #{tpu_custom_call.1} parent=39 // pred_fallthru
          _
      $region40: #{tpu_custom_call.1} parent=5 // pred_fallthru
        _
      %p874 = scmp.le.s32.totalorder 2, %s35
      // Predicated region
      $region61: #{tpu_custom_call.1} parent=5 // pred_check
        %p875 = pneg %p874
      $region62: #{tpu_custom_call.1} parent=5 // pred_check_branch
        %877 = sbr.rel (%p875) target = $region64
      $region63: #{tpu_custom_call.1} parent=5 // pred_region
        %s878 = ssub.s32 %s35, 2
        // Predicated region
        $region65: #{tpu_custom_call.1} parent=63 // pred_check
          %p879 = pneg %p219
        $region66: #{tpu_custom_call.1} parent=63 // pred_check_branch
          %881 = sbr.rel (%p879) target = $region68
        $region67: #{tpu_custom_call.1} parent=63 // pred_region
          %s882 = sand.u32 %s204, 1
          %s883 = scalar_lea.sflag [#allocation7], %s882
          %s884 = sand.u32 %s204, 1
          %s885 = smul.addr %s884, 8
          %s886 = scalar_lea.vmem [#allocation10], %s885
          %887 = dma.done %s883, 128
        $region68: #{tpu_custom_call.1} parent=63 // pred_fallthru
          _
        // Predicated region
        $region69: #{tpu_custom_call.1} parent=63 // pred_check
          %p888 = pneg %p245
        $region70: #{tpu_custom_call.1} parent=63 // pred_check_branch
          %890 = sbr.rel (%p888) target = $region72
        $region71: #{tpu_custom_call.1} parent=63 // pred_region
          %s891 = sand.u32 %s230, 1
          %s892 = scalar_lea.sflag [#allocation12], %s891
          %s893 = sand.u32 %s230, 1
          %s894 = smul.addr %s893, 8
          %s895 = scalar_lea.vmem [#allocation11], %s894
          %896 = dma.done %s892, 128
        $region72: #{tpu_custom_call.1} parent=63 // pred_fallthru
          _
      $region64: #{tpu_custom_call.1} parent=5 // pred_fallthru
        _
    $region6: #{tpu_custom_call.1} parent=1 // loop_footer
      %s39 = sadd.s32 1, %s35
    $region7: #{tpu_custom_call.1} parent=1 // loop_footer_branch
      %34 = sbr.rel target = $region3
    $region8: #{tpu_custom_call.1} parent=1 // loop_exit
      _
    %897 = vsyncpa [#allocation6], 1
    %s898 = scalar_lea.sflag [#allocation6], 1
    %899 = vsyncpa %s898, 1
    %900 = vsyncpa [#allocation7], 1
    %s901 = scalar_lea.sflag [#allocation7], 1
    %902 = vsyncpa %s901, 1
    %903 = vsyncpa [#allocation12], 1
    %s904 = scalar_lea.sflag [#allocation12], 1
    %905 = vsyncpa %s904, 1
    %906 = vsyncpa [#allocation8], 1
    %s907 = scalar_lea.sflag [#allocation8], 1
    %908 = vsyncpa %s907, 1

</llo_original>
